<compile_context>
chip_gen: v7x
topology: tpu7x:2x2x1
jax: 0.10.0
libtpu: 0.0.40
codegen_flags: <defaults>
</compile_context>

<pallas_src>
import functools

import numpy as np
import jax
import jax.numpy as jnp
from jax.experimental import pallas as pl
from jax.experimental.pallas import tpu as pltpu


def _cdiv(a, b):
    return (a + b - 1) // b


def _bilinear_matrix_np(dst_size, src_size):
    """Dense 1-D bilinear interpolation matrix, PyTorch align_corners=False semantics."""
    if dst_size == src_size:
        return np.eye(dst_size, dtype=np.float64)
    scale = src_size / dst_size
    d = np.arange(dst_size, dtype=np.float64)
    src = (d + 0.5) * scale - 0.5
    src = np.maximum(src, 0.0)
    x0 = np.minimum(np.floor(src).astype(np.int64), src_size - 1)
    x1 = np.minimum(x0 + 1, src_size - 1)
    lam = src - x0
    m = np.zeros((dst_size, src_size), dtype=np.float64)
    m[np.arange(dst_size), x0] += 1.0 - lam
    m[np.arange(dst_size), x1] += lam
    return m


def _vmem_capacity_bytes():
    try:
        return int(pltpu.get_tpu_info().vmem_capacity_bytes)
    except Exception:
        return 64 * 1024 * 1024          # conservative default (v7x per-TC VMEM)


def _choose_block_planes(nc, per_plane_bytes, fixed_bytes, budget_bytes, cap):
    """Planes per grid step: as many as fit the VMEM budget (multiple of 8 when tiling)."""
    g = (budget_bytes - fixed_bytes) // max(per_plane_bytes, 1)
    if cap is not None:
        g = min(g, cap)
    g = max(int(g), 1)
    g = min(g, nc)
    # v7x has 2 TensorCores sharing the "parallel" grid axis: keep >= 2 blocks when possible.
    if nc >= 16:
        half = ((_cdiv(nc, 2) + 7) // 8) * 8
        g = min(g, half)
    if g < nc:
        # A tiled second-to-last dim must be a multiple of 8 (full-dim blocks are exempt).
        g = max(8, (g // 8) * 8)
    return min(g, nc)


# ----------------------------------------------------------------------------
# Primary kernel: resize == one matmul with the kron interpolation matrix.
#   preds_ref : (G, H*W)      native dtype
#   tgt_ref   : (G, Hs*Ws)    native dtype
#   m_ref     : (Hs*Ws, H*W)  interp dtype, kron(A, Bm)^T
#   out_ref   : (1, 1, 128)   f32, lane-dense per-block partial sum
# ----------------------------------------------------------------------------
def _make_kron_kernel(nc_total, g_blk, mask_tail):
    def kernel(preds_ref, tgt_ref, m_ref, out_ref):
        x = tgt_ref[...].astype(m_ref.dtype)                                  # per-tile cast
        up = jnp.dot(x, m_ref[...], preferred_element_type=jnp.float32)      # (G, H*W)
        d = preds_ref[...].astype(jnp.float32) - up
        row_sums = jnp.sum(d * d, axis=1, keepdims=True)                     # (G, 1)
        if mask_tail:
            plane = (jax.lax.broadcasted_iota(jnp.int32, row_sums.shape, 0)
                     + pl.program_id(0) * g_blk)
            row_sums = jnp.where(plane < nc_total, row_sums, 0.0)            # ragged tail
        total = jnp.sum(row_sums, axis=0, keepdims=True)                     # (1, 1)
        out_ref[...] = jnp.broadcast_to(total.reshape(1, 1, 1), out_ref.shape)
    return kernel


# ----------------------------------------------------------------------------
# Fallback kernel (large spatial sizes): separable W-interp + batched H-interp.
#   preds_ref : (G, H, W), tgt_ref : (G, Hs, Ws)
#   a_ref     : (H, Hs)  row-interp matrix
#   b_ref     : (Ws, W)  col-interp matrix (pre-transposed)
# ----------------------------------------------------------------------------
def _make_separable_kernel(nc_total, g_blk, mask_tail):
    def kernel(preds_ref, tgt_ref, a_ref, b_ref, out_ref):
        g, hs, ws = tgt_ref.shape
        _, h, w = preds_ref.shape
        cdt = a_ref.dtype
        x = tgt_ref[...].astype(cdt)
        # W-interp: one tall matmul over every plane in the block.
        # (reshape is copy-free only when Hs % 8 == 0; otherwise a VMEM copy is materialized)
        t1 = jnp.dot(x.reshape(g * hs, ws), b_ref[...],
                     preferred_element_type=jnp.float32)                      # (G*Hs, W)
        t1 = t1.reshape(g, hs, w).astype(cdt)
        # TODO(synk): a single (H,Hs)@(Hs,G*W) matmul + relayout of the (G,Hs,W) intermediate
        # would avoid G per-plane MXU ops; kept batched for lowering robustness on this
        # rarely-taken large-spatial fallback path.
        a_b = jnp.broadcast_to(a_ref[...], (g, h, hs))
        up = jnp.einsum('ghp,gpw->ghw', a_b, t1,
                        preferred_element_type=jnp.float32)                   # (G, H, W)
        d = preds_ref[...].astype(jnp.float32) - up
        row_sums = jnp.sum(d * d, axis=-1)                                    # (G, H)
        if mask_tail:
            plane = (jax.lax.broadcasted_iota(jnp.int32, row_sums.shape, 0)
                     + pl.program_id(0) * g_blk)
            row_sums = jnp.where(plane < nc_total, row_sums, 0.0)
        col = jnp.sum(row_sums, axis=1, keepdims=True)                        # (G, 1)
        total = jnp.sum(col, axis=0, keepdims=True)                           # (1, 1)
        out_ref[...] = jnp.broadcast_to(total.reshape(1, 1, 1), out_ref.shape)
    return kernel


# ----------------------------------------------------------------------------
# Wrapper reproducing CriterionMSE.forward
# ----------------------------------------------------------------------------
@functools.partial(jax.jit,
                   static_argnames=("interp_dtype", "max_planes_per_block", "force_path"))
def criterion_mse(preds, target, *, interp_dtype=jnp.bfloat16,
                  max_planes_per_block=None, force_path=None):
    n, c, h, w = preds.shape
    nt, ct, hs, ws = target.shape
    assert (n, c) == (nt, ct), "preds and target must share (N, C)"
    nc, hw, hsws = n * c, h * w, hs * ws

    p_it = np.dtype(preds.dtype).itemsize
    t_it = np.dtype(target.dtype).itemsize
    c_it = np.dtype(interp_dtype).itemsize

    vmem_cap = _vmem_capacity_bytes()
    budget = (vmem_cap * 3) // 4                 # ~48 MiB on v7x, ~96 MiB on v5e/v6e
    vmem_limit = int(vmem_cap * 0.9)

    a_np = _bilinear_matrix_np(h, hs)            # (H, Hs)
    bm_np = _bilinear_matrix_np(w, ws)           # (W, Ws)

    # Fused (kron) path only while the kron matrix stays small and its extra FLOPs stay well
    # under the HBM roofline; otherwise fall back to the separable two-matmul path.
    use_kron = (hsws * hw * c_it <= 4 * 1024 * 1024) and (hsws <= 512)
    if force_path == "kron":
        use_kron = True
    elif force_path == "separable":
        use_kron = False

    params = pltpu.CompilerParams(dimension_semantics=("parallel",),
                                  vmem_limit_bytes=vmem_limit)

    if use_kron:
        m = jnp.asarray(np.kron(a_np, bm_np).T, dtype=interp_dtype)   # (Hs*Ws, H*W)
        preds2 = preds.reshape(nc, hw)            # free reshapes -- no extra HBM pass
        tgt2 = target.reshape(nc, hsws)
        # Double-buffered inputs + tgt cast + preds(f32)/up/d/sq intermediates.
        per_plane = 2 * (hw * p_it + hsws * t_it) + hsws * c_it + 16 * hw
        fixed = 2 * hsws * hw * c_it + (1 << 20)
        g = _choose_block_planes(nc, per_plane, fixed, budget, max_planes_per_block)
        num_blocks = _cdiv(nc, g)
        mask_tail = num_blocks * g != nc
        partial = pl.pallas_call(
            _make_kron_kernel(nc, g, mask_tail),
            out_shape=jax.ShapeDtypeStruct((num_blocks, 1, 128), jnp.float32),
            grid=(num_blocks,),
            in_specs=[
                pl.BlockSpec((g, hw), lambda i: (i, 0)),
                pl.BlockSpec((g, hsws), lambda i: (i, 0)),
                pl.BlockSpec((hsws, hw), lambda i: (0, 0)),       # resident interp matrix
            ],
            out_specs=pl.BlockSpec((1, 1, 128), lambda i: (i, 0, 0)),
            compiler_params=params,
        )(preds2, tgt2, m)
    else:
        a = jnp.asarray(a_np, dtype=interp_dtype)        # (H, Hs)
        b = jnp.asarray(bm_np.T, dtype=interp_dtype)     # (Ws, W)
        preds3 = preds.reshape(nc, h, w)
        tgt3 = target.reshape(nc, hs, ws)
        per_plane = (2 * (hw * p_it + hsws * t_it) + hsws * c_it
                     + hs * w * (4 + c_it) + h * hs * c_it + 16 * hw)
        fixed = 2 * (h * hs + ws * w) * c_it + (1 << 20)
        g = _choose_block_planes(nc, per_plane, fixed, budget, max_planes_per_block)
        num_blocks = _cdiv(nc, g)
        mask_tail = num_blocks * g != nc
        partial = pl.pallas_call(
            _make_separable_kernel(nc, g, mask_tail),
            out_shape=jax.ShapeDtypeStruct((num_blocks, 1, 128), jnp.float32),
            grid=(num_blocks,),
            in_specs=[
                pl.BlockSpec((g, h, w), lambda i: (i, 0, 0)),
                pl.BlockSpec((g, hs, ws), lambda i: (i, 0, 0)),
                pl.BlockSpec((h, hs), lambda i: (0, 0)),
                pl.BlockSpec((ws, w), lambda i: (0, 0)),
            ],
            out_specs=pl.BlockSpec((1, 1, 128), lambda i: (i, 0, 0)),
            compiler_params=params,
        )(preds3, tgt3, a, b)

    # Mean over preds' element count, matching nn.MSELoss(reduction='mean').
    return jnp.sum(partial[:, 0, 0]) / jnp.float32(n * c * h * w)


# ----------------------------------------------------------------------------
# Pure-JAX reference (same math, full f32) for the correctness check.
# ----------------------------------------------------------------------------
def _reference(preds, target):
    n, c, h, w = preds.shape
    hs, ws = target.shape[2], target.shape[3]
    a = jnp.asarray(_bilinear_matrix_np(h, hs), dtype=jnp.float32)
    bm = jnp.asarray(_bilinear_matrix_np(w, ws), dtype=jnp.float32)
    up = jnp.einsum('hp,ncpq,wq->nchw', a, target.astype(jnp.float32), bm,
                    precision='highest')
    return jnp.mean((preds.astype(jnp.float32) - up) ** 2)


if __name__ == "__main__":
    key = jax.random.PRNGKey(0)
    k1, k2, k3, k4 = jax.random.split(key, 4)

    N, C = 2, 4
    H, W = 16, 16      # preds spatial size (target is upsampled to this)
    Hs, Ws = 8, 8      # target spatial size

    preds = jax.random.normal(k1, (N, C, H, W), dtype=jnp.float32)
    target = jax.random.normal(k2, (N, C, Hs, Ws), dtype=jnp.float32)
    ref = jax.block_until_ready(_reference(preds, target))

    # f32 interp path (kron) -- close to bit-faithful PyTorch f32 MSE.
    out_f32 = jax.block_until_ready(criterion_mse(preds, target, interp_dtype=jnp.float32))
    assert np.allclose(np.asarray(out_f32), np.asarray(ref), rtol=2e-3, atol=1e-6), (out_f32, ref)

    # default bf16 interp path (halves interp-matmul traffic; f32 accumulate & diff).
    out_bf16 = jax.block_until_ready(criterion_mse(preds, target))
    assert np.allclose(np.asarray(out_bf16), np.asarray(ref), rtol=1e-2, atol=1e-4), (out_bf16, ref)

    # ragged last block: nc=15 split into blocks of 8 -> in-kernel tail masking exercised.
    preds_r = jax.random.normal(k3, (3, 5, H, W), dtype=jnp.float32)
    target_r = jax.random.normal(k4, (3, 5, Hs, Ws), dtype=jnp.float32)
    ref_r = jax.block_until_ready(_reference(preds_r, target_r))
    out_r = jax.block_until_ready(
        criterion_mse(preds_r, target_r, interp_dtype=jnp.float32, max_planes_per_block=8))
    assert np.allclose(np.asarray(out_r), np.asarray(ref_r), rtol=2e-3, atol=1e-6), (out_r, ref_r)

    # large-spatial fallback path (separable kernel), forced at small shapes for coverage.
    out_sep = jax.block_until_ready(
        criterion_mse(preds, target, interp_dtype=jnp.float32, force_path="separable"))
    assert np.allclose(np.asarray(out_sep), np.asarray(ref), rtol=2e-3, atol=1e-6), (out_sep, ref)

    print("KERNEL_OK")
</pallas_src>

<mosaic_0001>
module attributes {stable_mosaic.version = 11 : i64} {
  func.func @kernel(%arg0: i32, %arg1: memref<8x256xf32, #tpu.memory_space<vmem>>, %arg2: memref<8x64xf32, #tpu.memory_space<vmem>>, %arg3: memref<64x256xf32, #tpu.memory_space<vmem>>, %arg4: memref<1x1x128xf32, #tpu.memory_space<vmem>>) attributes {dimension_semantics = [#tpu.dimension_semantics<parallel>], iteration_bounds = array<i64: 1>, scalar_prefetch = 0 : i64, scratch_operands = 0 : i64, tpu.core_type = #tpu.core_type<tc>, window_params = [{transform_indices = @transform_0, window_bounds = array<i64: 8, 256>}, {transform_indices = @transform_1, window_bounds = array<i64: 8, 64>}, {pipeline_mode = #tpu.pipeline_mode<synchronous>, transform_indices = @transform_2, window_bounds = array<i64: 64, 256>}, {transform_indices = @transform_3, window_bounds = array<i64: 1, 1, 128>}]} {
    %c0 = arith.constant 0 : index
    %c0_0 = arith.constant 0 : index
    %0 = vector.load %arg2[%c0, %c0_0] : memref<8x64xf32, #tpu.memory_space<vmem>>, vector<8x64xf32>
    %c0_1 = arith.constant 0 : index
    %c0_2 = arith.constant 0 : index
    %1 = vector.load %arg3[%c0_1, %c0_2] : memref<64x256xf32, #tpu.memory_space<vmem>>, vector<64x256xf32>
    %cst = arith.constant dense<0.000000e+00> : vector<8x256xf32>
    %2 = tpu.matmul %0, %1, %cst {dimension_numbers = #tpu.dot_dimension_numbers<[1], [0], [0], [1], [0, 0, 1, 1], [], []>} : vector<8x64xf32>, vector<64x256xf32>, vector<8x256xf32> -> vector<8x256xf32>
    %c0_3 = arith.constant 0 : index
    %c0_4 = arith.constant 0 : index
    %3 = vector.load %arg1[%c0_3, %c0_4] : memref<8x256xf32, #tpu.memory_space<vmem>>, vector<8x256xf32>
    %4 = arith.subf %3, %2 : vector<8x256xf32>
    %5 = arith.mulf %4, %4 : vector<8x256xf32>
    %cst_5 = arith.constant dense<0.000000e+00> : vector<8xf32>
    %6 = vector.multi_reduction <add>, %5, %cst_5 [1] : vector<8x256xf32> to vector<8xf32>
    %7 = vector.shape_cast %6 : vector<8xf32> to vector<8x1xf32>
    %cst_6 = arith.constant dense<0.000000e+00> : vector<1xf32>
    %8 = vector.multi_reduction <add>, %7, %cst_6 [0] : vector<8x1xf32> to vector<1xf32>
    %9 = vector.shape_cast %8 : vector<1xf32> to vector<1x1xf32>
    %10 = vector.shape_cast %9 : vector<1x1xf32> to vector<1x1x1xf32>
    %11 = vector.shape_cast %10 : vector<1x1x1xf32> to vector<1x1x1xf32>
    %12 = vector.broadcast %11 : vector<1x1x1xf32> to vector<1x1x128xf32>
    %c0_7 = arith.constant 0 : index
    %c0_8 = arith.constant 0 : index
    %c0_9 = arith.constant 0 : index
    %13 = vector.load %arg4[%c0_7, %c0_8, %c0_9] : memref<1x1x128xf32, #tpu.memory_space<vmem>>, vector<1x1x128xf32>
    tpu.vector_store %arg4[%c0_7, %c0_8, %c0_9], %12 {strides = array<i32>} : memref<1x1x128xf32, #tpu.memory_space<vmem>>, vector<1x1x128xf32>,
    return
  }
  func.func @transform_0(%arg0: i32) -> (i32, i32) {
    %c0_i32 = arith.constant 0 : i32
    %c0_i32_0 = arith.constant 0 : i32
    return %arg0, %c0_i32 : i32, i32
  }
  func.func @transform_1(%arg0: i32) -> (i32, i32) {
    %c0_i32 = arith.constant 0 : i32
    %c0_i32_0 = arith.constant 0 : i32
    return %arg0, %c0_i32 : i32, i32
  }
  func.func @transform_2(%arg0: i32) -> (i32, i32) {
    %c0_i32 = arith.constant 0 : i32
    %c0_i32_0 = arith.constant 0 : i32
    %c0_i32_1 = arith.constant 0 : i32
    return %c0_i32, %c0_i32_0 : i32, i32
  }
  func.func @transform_3(%arg0: i32) -> (i32, i32, i32) {
    %c0_i32 = arith.constant 0 : i32
    %c0_i32_0 = arith.constant 0 : i32
    %c0_i32_1 = arith.constant 0 : i32
    return %arg0, %c0_i32, %c0_i32_0 : i32, i32, i32
  }
}

</mosaic_0001>

<llo_original>
// kernel: criterion_mse.1
$region0: #{criterion_mse.1}
  #allocation0 [shape = 'u32[]', space=smem, size = 0x4, offset = 0x4, fixed_abs, tag = 'smem constant byte address 0x4 - core index']
  #allocation1 [shape = 'u32[144,128]{1,0:T(1,128)}', space=vmem, size = 0x12000, scoped, tag = 'internal scratch']
  %s0 = inlined_call_operand.vmem [shape: f32[8,256], index: 0, kind: input, shape index: {}]
  %s1 = inlined_call_operand.vmem [shape: f32[8,64], index: 1, kind: input, shape index: {}]
  %s2 = inlined_call_operand.vmem [shape: f32[64,256], index: 2, kind: input, shape index: {}]
  %s3 = inlined_call_operand.vmem [shape: f32[1,1,128], index: 3, kind: output, shape index: {}]
  %s4 = sld [smem:[#allocation0]]
  $region22: #{criterion_mse.1} parent=0
    _
  %s6 = ssub.s32 1, %s4
  %s7 = scalar_select 0, %s6, %s4
  // Predicated region
  $region2: #{criterion_mse.1} parent=0 // pred_check
    _
  $region3: #{criterion_mse.1} parent=0 // pred_check_branch
    %9 = sbr.rel (0) target = $region5
  $region4: #{criterion_mse.1} parent=0 // pred_region
    _
  $region5: #{criterion_mse.1} parent=0 // pred_fallthru
    _
  // Predicated region
  $region6: #{criterion_mse.1} parent=0 // pred_check
    _
  $region7: #{criterion_mse.1} parent=0 // pred_check_branch
    %11 = sbr.rel (0) target = $region9
  $region8: #{criterion_mse.1} parent=0 // pred_region
    _
  $region9: #{criterion_mse.1} parent=0 // pred_fallthru
    _
  // Predicated region
  $region10: #{criterion_mse.1} parent=0 // pred_check
    _
  $region11: #{criterion_mse.1} parent=0 // pred_check_branch
    %13 = sbr.rel (0) target = $region13
  $region12: #{criterion_mse.1} parent=0 // pred_region
    _
  $region13: #{criterion_mse.1} parent=0 // pred_fallthru
    _
  %v14 = vld [vmem:[%s1] sm:$0xff]
  %v15 = vld [vmem:[%s2] sm:$0xff]
  %v16 = vld [vmem:[%s2 + $0x8] sm:$0xff]
  %v17 = vld [vmem:[%s2 + $0x10] sm:$0xff]
  %v18 = vld [vmem:[%s2 + $0x18] sm:$0xff]
  %v19 = vld [vmem:[%s2 + $0x20] sm:$0xff]
  %v20 = vld [vmem:[%s2 + $0x28] sm:$0xff]
  %v21 = vld [vmem:[%s2 + $0x30] sm:$0xff]
  %v22 = vld [vmem:[%s2 + $0x38] sm:$0xff]
  %v23 = vld [vmem:[%s2 + $0x40] sm:$0xff]
  %v24 = vld [vmem:[%s2 + $0x48] sm:$0xff]
  %v25 = vld [vmem:[%s2 + $0x50] sm:$0xff]
  %v26 = vld [vmem:[%s2 + $0x58] sm:$0xff]
  %v27 = vld [vmem:[%s2 + $0x60] sm:$0xff]
  %v28 = vld [vmem:[%s2 + $0x68] sm:$0xff]
  %v29 = vld [vmem:[%s2 + $0x70] sm:$0xff]
  %v30 = vld [vmem:[%s2 + $0x78] sm:$0xff]
  %vm31 = vcmask 523264
  %v33 = vsel %vm31, %v14, 0
  %35 = vmatprep.subr.mxu0 %v16
  %36 = vmatpush1.msra.mxu0 %v15
  %37 = vmatprep.subr.mxu0 %v18
  %38 = vmatpush1.msra.mxu0 %v17
  %39 = vmatprep.subr.mxu0 %v20
  %40 = vmatpush1.msra.mxu0 %v19
  %41 = vmatprep.subr.mxu0 %v22
  %42 = vmatpush1.msra.mxu0 %v21
  %43 = vmatprep.subr.mxu0 %v24
  %44 = vmatpush1.msra.mxu0 %v23
  %45 = vmatprep.subr.mxu0 %v26
  %46 = vmatpush1.msra.mxu0 %v25
  %47 = vmatprep.subr.mxu0 %v28
  %48 = vmatpush1.msra.mxu0 %v27
  %49 = vmatprep.subr.mxu0 %v30
  %50 = vmatpush1.msra.mxu0 %v29
  %51 = vmatprep.subr.mxu0 0.0
  %52 = vmatpush1.msra.mxu0 0.0
  %53 = vmatprep.subr.mxu0 0.0
  %54 = vmatpush1.msra.mxu0 0.0
  %55 = vmatprep.subr.mxu0 0.0
  %56 = vmatpush1.msra.mxu0 0.0
  %57 = vmatprep.subr.mxu0 0.0
  %58 = vmatpush1.msra.mxu0 0.0
  %59 = vmatprep.subr.mxu0 0.0
  %60 = vmatpush1.msra.mxu0 0.0
  %61 = vmatprep.subr.mxu0 0.0
  %62 = vmatpush1.msra.mxu0 0.0
  %63 = vmatprep.subr.mxu0 0.0
  %64 = vmatpush1.msra.mxu0 0.0
  %65 = vmatprep.subr.mxu0 0.0
  %66 = vmatpush1.msra.mxu0 0.0
  %67 = vmatprep.subr.mxu0 0.0
  %68 = vmatpush1.msra.mxu0 0.0
  %69 = vmatprep.subr.mxu0 0.0
  %70 = vmatpush1.msra.mxu0 0.0
  %71 = vmatprep.subr.mxu0 0.0
  %72 = vmatpush1.msra.mxu0 0.0
  %73 = vmatprep.subr.mxu0 0.0
  %74 = vmatpush1.msra.mxu0 0.0
  %75 = vmatprep.subr.mxu0 0.0
  %76 = vmatpush1.msra.mxu0 0.0
  %77 = vmatprep.subr.mxu0 0.0
  %78 = vmatpush1.msra.mxu0 0.0
  %79 = vmatprep.subr.mxu0 0.0
  %80 = vmatpush1.msra.mxu0 0.0
  %81 = vmatprep.subr.mxu0 0.0
  %82 = vmatpush1.msra.mxu0 0.0
  %83 = vmatprep.subr.mxu0 0.0
  %84 = vmatpush1.msra.mxu0 0.0
  %85 = vmatprep.subr.mxu0 0.0
  %86 = vmatpush1.msra.mxu0 0.0
  %87 = vmatprep.subr.mxu0 0.0
  %88 = vmatpush1.msra.mxu0 0.0
  %89 = vmatprep.subr.mxu0 0.0
  %90 = vmatpush1.msra.mxu0 0.0
  %91 = vmatprep.subr.mxu0 0.0
  %92 = vmatpush1.msra.mxu0 0.0
  %93 = vmatprep.subr.mxu0 0.0
  %94 = vmatpush1.msra.mxu0 0.0
  %95 = vmatprep.subr.mxu0 0.0
  %96 = vmatpush1.msra.mxu0 0.0
  %97 = vmatprep.subr.mxu0 0.0
  %98 = vmatpush1.msra.mxu0 0.0
  %99 = vmatprep.mubr.f32.mxu0 0.0
  %100 = vmatmul.mubr.f32.gmra.mrb[0].mxu0 %v33
  %v101 = vpop.f32.mrb[0].mxu0
  %v102 = vadd.f32 0.0, %v101
  %v103 = vpop.f32.mrb[0].mxu0
  %v104 = vadd.f32 0.0, %v103
  %105 = vdwg.mxu0
  %v106 = vld [vmem:[%s0] sm:$0xff]
  %v107 = vld [vmem:[%s0 + $0x8] sm:$0xff]
  %v108 = vsub.f32 %v106, %v102
  %v109 = vsub.f32 %v107, %v104
  %v110 = vmul.f32 %v108, %v108
  %v111 = vmul.f32 %v109, %v109
  %v112 = vadd.f32 %v110, %v111
  %113 = vadd.xlane.f32.xlu0 %v112
  %v114 = vpop.xlane.xlu0 %113
  %v115 = vrot.slane %v114, 4
  %v116 = vadd.f32 %v114, %v115
  %v117 = vrot.slane %v116, 2
  %v118 = vadd.f32 %v116, %v117
  %v119 = vrot.slane %v118, 1
  %v120 = vadd.f32 %v118, %v119
  %121 = vst [vmem:[%s3] sm:$0x1] %v120
  // Predicated region
  $region14: #{criterion_mse.1} parent=0 // pred_check
    _
  $region15: #{criterion_mse.1} parent=0 // pred_check_branch
    %123 = sbr.rel (0) target = $region17
  $region16: #{criterion_mse.1} parent=0 // pred_region
    _
  $region17: #{criterion_mse.1} parent=0 // pred_fallthru
    _
  // Predicated region
  $region18: #{criterion_mse.1} parent=0 // pred_check
    _
  $region19: #{criterion_mse.1} parent=0 // pred_check_branch
    %125 = sbr.rel (0) target = $region21
  $region20: #{criterion_mse.1} parent=0 // pred_region
    _
  $region21: #{criterion_mse.1} parent=0 // pred_fallthru
    _

</llo_original>
